<compile_context>
chip_gen: v6e
topology: v6e:2x2x1
jax: 0.10.0
libtpu: 0.0.40
codegen_flags: <defaults>
</compile_context>

<pallas_src>
import math
from typing import NamedTuple, Optional

import jax
import jax.numpy as jnp
from jax.experimental import pallas as pl
from jax.experimental.pallas import tpu as pltpu


def _round_up(x, m):
    return ((x + m - 1) // m) * m


def _vmem_budget_bytes():
    """Generation-aware VMEM budget (v7x has 64 MiB physical vs 128 MiB on v5e/v6e)."""
    cap = 64 << 20  # conservative (v7x-safe) fallback
    try:
        cap = int(pltpu.get_tpu_info().vmem_capacity_bytes)
    except Exception:
        pass
    return max(24 << 20, min(int(cap * 0.70), 96 << 20))


class _Plan(NamedTuple):
    fast: bool        # True -> whole reduction in one K block (no K grid axis)
    tk: int           # K block size (== Kp in the fast path)
    tn: int           # N block size (multiple of 128)
    Kp: int           # padded in_dim held by the prepared weight
    Np: int           # padded out_dim held by the prepared weight
    vmem_budget: int  # vmem_limit_bytes to hand to Mosaic


class EqualLinearParams(NamedTuple):
    w_t: jax.Array    # (Kp, Np): weight pre-scaled by `scale`, transposed, zero-padded, compute dtype
    b2d: jax.Array    # (1, Np): bias * lr_mul, float32, zero-padded
    in_dim: int
    out_dim: int
    plan: _Plan


def _plan_tiles(in_dim, out_dim, w_itemsize, *, tk=None, tn=None):
    budget = _vmem_budget_bytes()
    weight_share = int(budget * 0.6)  # double-buffered weight tile gets the lion's share
    Nfull = _round_up(out_dim, 128)

    fast = (tk is None) or (tk >= in_dim)
    if fast:
        k_blk = in_dim          # whole reduction in one block -> no K padding needed at all
        Kp = in_dim
    else:
        k_blk = min(_round_up(tk, 128), _round_up(in_dim, 128))
        Kp = _round_up(in_dim, k_blk)

    if tn is None:
        tn_c = min(1024, Nfull)
        # v7x has 2 TensorCores: if the weight is big enough to matter, make sure there
        # are >= 2 blocks on the parallel N axis. Tiny layers stay single-block (the
        # per-grid-step overhead dominates there).
        if Nfull >= 256 and in_dim * Nfull * w_itemsize >= (1 << 20):
            tn_c = min(tn_c, max(128, (Nfull // 2) // 128 * 128))
        while tn_c > 128 and 2 * k_blk * tn_c * w_itemsize > weight_share:
            tn_c = max(128, _round_up(tn_c // 2, 128))
    else:
        tn_c = min(_round_up(tn, 128), Nfull)

    # If even the narrowest lane-aligned weight tile does not fit with the full K,
    # fall back to the K-tiled path with tk derived from the budget.
    if fast and 2 * k_blk * tn_c * w_itemsize > weight_share:
        fast = False
        k_blk = max(128, (weight_share // (2 * tn_c * w_itemsize)) // 128 * 128)
        k_blk = min(k_blk, _round_up(in_dim, 128))
        Kp = _round_up(in_dim, k_blk)

    Np = _round_up(out_dim, tn_c)
    return _Plan(fast=fast, tk=k_blk, tn=tn_c, Kp=Kp, Np=Np, vmem_budget=budget)


def _pick_tm(B, compute_dtype):
    # 16-row alignment for packed (bf16) sublanes, 8 for f32; large B -> bigger M tiles
    # (fewer grid steps / fewer weight re-reads in the K-tiled path), 256-multiples for
    # the 256x256 MXUs on v6e/v7x.
    align = 16 if jnp.dtype(compute_dtype).itemsize < 4 else 8
    if B >= 512:
        return 512
    if B >= 256:
        return 256
    return min(256, _round_up(B, align))


# ---------------------------------------------------------------------------
# Kernels
# ---------------------------------------------------------------------------

def _equal_linear_kernel_fast(x_ref, w_ref, b_ref, o_ref):
    # x: (tm, K), w: (K, tn) pre-scaled, b: (1, tn) pre-multiplied by lr_mul, o: (tm, tn).
    acc = jnp.dot(x_ref[...].astype(w_ref.dtype), w_ref[...],
                  preferred_element_type=jnp.float32)
    o_ref[...] = (acc + b_ref[...]).astype(o_ref.dtype)


def _equal_linear_kernel_ktiled(x_ref, w_ref, b_ref, o_ref, acc_ref):
    k = pl.program_id(2)

    @pl.when(k == 0)
    def _():
        acc_ref[...] = jnp.zeros_like(acc_ref)

    acc_ref[...] += jnp.dot(x_ref[...].astype(w_ref.dtype), w_ref[...],
                            preferred_element_type=jnp.float32)

    @pl.when(k == pl.num_programs(2) - 1)
    def _():
        o_ref[...] = (acc_ref[...] + b_ref[...]).astype(o_ref.dtype)


# ---------------------------------------------------------------------------
# Parameter prep (one-time, at module init) + per-call apply
# ---------------------------------------------------------------------------

def prepare_equal_linear_params(weight, bias, *, lr_mul=1.0,
                                compute_dtype=jnp.bfloat16, tk=None, tn=None):
    """One-time parameter preparation. Call ONCE per module, not per forward.

    Folds the equalized-lr scale into the weight, transposes it to (in_dim, out_dim)
    (so the kernel does a plain row-major matmul with no transpose), zero-pads K/N to
    the chosen tile multiples, and casts to the MXU compute dtype (bf16 by default).
    """
    out_dim, in_dim = weight.shape
    assert bias is not None and bias.shape == (out_dim,)
    compute_dtype = jnp.dtype(compute_dtype)
    plan = _plan_tiles(in_dim, out_dim, compute_dtype.itemsize, tk=tk, tn=tn)

    scale = 1.0 / math.sqrt(in_dim) * lr_mul
    w_t = (weight.astype(jnp.float32) * scale).T                      # (in_dim, out_dim)
    w_t = jnp.pad(w_t, ((0, plan.Kp - in_dim), (0, plan.Np - out_dim)))
    w_t = w_t.astype(compute_dtype)

    b2d = bias.astype(jnp.float32) * lr_mul
    b2d = jnp.pad(b2d, (0, plan.Np - out_dim)).reshape(1, plan.Np)

    return EqualLinearParams(w_t=w_t, b2d=b2d, in_dim=in_dim, out_dim=out_dim, plan=plan)


def equal_linear_apply(x, params: EqualLinearParams, *, tm: Optional[int] = None,
                       weight_buffer_count: Optional[int] = None):
    """EqualLinear forward with pre-prepared parameters. x: (B, in_dim) -> (B, out_dim)."""
    B, in_dim = x.shape
    assert in_dim == params.in_dim
    plan = params.plan
    tk, tn, Kp, Np = plan.tk, plan.tn, plan.Kp, plan.Np
    out_dim = params.out_dim
    if tm is None:
        tm = _pick_tm(B, params.w_t.dtype)
    grid_m = pl.cdiv(B, tm)
    grid_n = Np // tn

    # Only the K tail must be zero for correctness (it is a reduction axis); ragged
    # M / N edge blocks are handled by Pallas (OOB output rows/cols are discarded).
    xp = x
    if (not plan.fast) and Kp != in_dim:
        xp = jnp.pad(x, ((0, 0), (0, Kp - in_dim)))

    cost = pl.CostEstimate(
        flops=2 * B * Kp * Np,
        transcendentals=0,
        bytes_accessed=(B * Kp * x.dtype.itemsize
                        + Kp * Np * params.w_t.dtype.itemsize
                        + Np * 4
                        + B * Np * x.dtype.itemsize))

    if plan.fast:
        # grid = (N, M): weight block index is invariant along the inner M axis, so
        # Pallas skips its re-DMA -> the weight streams from HBM exactly once per call,
        # independent of batch size. No accumulator scratch / epilogue bookkeeping.
        return pl.pallas_call(
            _equal_linear_kernel_fast,
            out_shape=jax.ShapeDtypeStruct((B, out_dim), x.dtype),
            grid_spec=pltpu.PrefetchScalarGridSpec(
                num_scalar_prefetch=0,
                grid=(grid_n, grid_m),
                in_specs=[
                    pl.BlockSpec((tm, Kp), lambda j, i: (i, 0)),   # x tile
                    pl.BlockSpec((Kp, tn), lambda j, i: (0, j)),   # weight (resident over i)
                    pl.BlockSpec((1, tn), lambda j, i: (0, j)),    # bias tile
                ],
                out_specs=pl.BlockSpec((tm, tn), lambda j, i: (i, j)),
            ),
            compiler_params=pltpu.CompilerParams(
                dimension_semantics=("parallel", "parallel"),
                vmem_limit_bytes=plan.vmem_budget),
            cost_estimate=cost,
        )(xp, params.w_t, params.b2d)

    # General K-tiled path (large in_dim): f32 VMEM accumulator, K innermost/arbitrary.
    grid_k = Kp // tk
    w_spec_kwargs = {}
    if weight_buffer_count is not None and weight_buffer_count > 2:
        # Opt-in: sweep 2 vs 3 weight buffers if xprof shows exposed weight DMA.
        w_spec_kwargs["pipeline_mode"] = pl.Buffered(weight_buffer_count)
    return pl.pallas_call(
        _equal_linear_kernel_ktiled,
        out_shape=jax.ShapeDtypeStruct((B, out_dim), x.dtype),
        grid_spec=pltpu.PrefetchScalarGridSpec(
            num_scalar_prefetch=0,
            grid=(grid_m, grid_n, grid_k),
            in_specs=[
                pl.BlockSpec((tm, tk), lambda i, j, k: (i, k)),                 # x tile
                pl.BlockSpec((tk, tn), lambda i, j, k: (k, j), **w_spec_kwargs),  # weight tile
                pl.BlockSpec((1, tn), lambda i, j, k: (0, j)),                  # bias tile
            ],
            out_specs=pl.BlockSpec((tm, tn), lambda i, j, k: (i, j)),
            scratch_shapes=[pltpu.VMEM((tm, tn), jnp.float32)],
        ),
        compiler_params=pltpu.CompilerParams(
            dimension_semantics=("parallel", "parallel", "arbitrary"),
            vmem_limit_bytes=plan.vmem_budget),
        cost_estimate=cost,
    )(xp, params.w_t, params.b2d)


def equal_linear(x, weight, bias, *, lr_mul=1.0, compute_dtype=jnp.bfloat16,
                 tm=None, tk=None, tn=None):
    """One-shot helper: parameter prep + apply.

    In real use, hoist prepare_equal_linear_params() to module init so the weight
    transpose / pad / cast is paid once, not on every forward call.
    """
    params = prepare_equal_linear_params(weight, bias, lr_mul=lr_mul,
                                         compute_dtype=compute_dtype, tk=tk, tn=tn)
    return equal_linear_apply(x, params, tm=tm)


def _reference(x, weight, bias, lr_mul):
    scale = 1.0 / math.sqrt(x.shape[1]) * lr_mul
    return x @ (weight * scale).T + bias * lr_mul


if __name__ == "__main__":
    # TODO(synk): if the module is constructed with activation='fused_lrelu', the original
    # repo applies fused_leaky_relu *after* this linear elsewhere; forward() itself has no
    # activation, and none is applied here.
    key = jax.random.PRNGKey(0)

    # Case 1: module-like small shapes, exact-f32 compute path (tight tolerance).
    k1, k2, key = jax.random.split(key, 3)
    batch, in_dim, out_dim = 8, 32, 16
    lr_mul = 1.0
    x = jax.random.normal(k1, (batch, in_dim), dtype=jnp.float32)
    weight = jax.random.normal(k2, (out_dim, in_dim), dtype=jnp.float32) / lr_mul
    bias = jnp.zeros((out_dim,), dtype=jnp.float32)

    out = jax.block_until_ready(
        equal_linear(x, weight, bias, lr_mul=lr_mul, compute_dtype=jnp.float32))
    ref = _reference(x, weight, bias, lr_mul)
    assert out.shape == (batch, out_dim)
    assert jnp.allclose(out, ref, atol=1e-5, rtol=1e-5), "case 1 mismatch"

    # Case 2: recommended bf16-operand / f32-accumulate path, ragged out_dim, lr_mul != 1.
    k3, k4, key = jax.random.split(key, 3)
    batch2, in_dim2, out_dim2 = 16, 640, 200
    lr_mul2 = 0.5
    x2 = jax.random.normal(k3, (batch2, in_dim2), dtype=jnp.float32)
    weight2 = jax.random.normal(k4, (out_dim2, in_dim2), dtype=jnp.float32) / lr_mul2
    bias2 = jnp.full((out_dim2,), 0.1, dtype=jnp.float32)

    params2 = prepare_equal_linear_params(weight2, bias2, lr_mul=lr_mul2,
                                          compute_dtype=jnp.bfloat16)
    out2 = jax.block_until_ready(equal_linear_apply(x2, params2))
    ref2 = _reference(x2, weight2, bias2, lr_mul2)
    assert out2.shape == (batch2, out_dim2)
    assert jnp.allclose(out2, ref2, atol=5e-2, rtol=5e-2), "case 2 mismatch (bf16 path)"

    # Case 3: force the K-tiled path (tk < in_dim), ragged batch and N grid > 1, f32.
    k5, k6, key = jax.random.split(key, 3)
    batch3, in_dim3, out_dim3 = 40, 640, 384
    x3 = jax.random.normal(k5, (batch3, in_dim3), dtype=jnp.float32)
    weight3 = jax.random.normal(k6, (out_dim3, in_dim3), dtype=jnp.float32)
    bias3 = jnp.full((out_dim3,), -0.2, dtype=jnp.float32)

    out3 = jax.block_until_ready(
        equal_linear(x3, weight3, bias3, lr_mul=1.0, compute_dtype=jnp.float32,
                     tk=256, tn=128))
    ref3 = _reference(x3, weight3, bias3, 1.0)
    assert out3.shape == (batch3, out_dim3)
    assert jnp.allclose(out3, ref3, atol=1e-4, rtol=1e-4), "case 3 mismatch (K-tiled path)"

    print("KERNEL_OK")
</pallas_src>

<mosaic_0001>
module attributes {stable_mosaic.version = 11 : i64} {
  func.func @_equal_linear_kernel_fast(%arg0: i32, %arg1: i32, %arg2: memref<8x32xf32, #tpu.memory_space<vmem>>, %arg3: memref<32x128xf32, #tpu.memory_space<vmem>>, %arg4: memref<1x128xf32, #tpu.memory_space<vmem>>, %arg5: memref<8x128xf32, #tpu.memory_space<vmem>>) attributes {dimension_semantics = [#tpu.dimension_semantics<parallel>, #tpu.dimension_semantics<parallel>], iteration_bounds = array<i64: 1, 1>, scalar_prefetch = 0 : i64, scratch_operands = 0 : i64, tpu.core_type = #tpu.core_type<tc>, window_params = [{transform_indices = @transform_0, window_bounds = array<i64: 8, 32>}, {transform_indices = @transform_1, window_bounds = array<i64: 32, 128>}, {transform_indices = @transform_2, window_bounds = array<i64: 1, 128>}, {transform_indices = @transform_3, window_bounds = array<i64: 8, 128>}]} {
    %c0 = arith.constant 0 : index
    %c0_0 = arith.constant 0 : index
    %0 = vector.load %arg2[%c0, %c0_0] : memref<8x32xf32, #tpu.memory_space<vmem>>, vector<8x32xf32>
    %c0_1 = arith.constant 0 : index
    %c0_2 = arith.constant 0 : index
    %1 = vector.load %arg3[%c0_1, %c0_2] : memref<32x128xf32, #tpu.memory_space<vmem>>, vector<32x128xf32>
    %cst = arith.constant dense<0.000000e+00> : vector<8x128xf32>
    %2 = tpu.matmul %0, %1, %cst {dimension_numbers = #tpu.dot_dimension_numbers<[1], [0], [0], [1], [0, 0, 1, 1], [], []>} : vector<8x32xf32>, vector<32x128xf32>, vector<8x128xf32> -> vector<8x128xf32>
    %c0_3 = arith.constant 0 : index
    %c0_4 = arith.constant 0 : index
    %3 = vector.load %arg4[%c0_3, %c0_4] : memref<1x128xf32, #tpu.memory_space<vmem>>, vector<1x128xf32>
    %4 = vector.broadcast %3 : vector<1x128xf32> to vector<8x128xf32>
    %5 = arith.addf %2, %4 : vector<8x128xf32>
    %c0_5 = arith.constant 0 : index
    %c0_6 = arith.constant 0 : index
    %6 = vector.load %arg5[%c0_5, %c0_6] : memref<8x128xf32, #tpu.memory_space<vmem>>, vector<8x128xf32>
    tpu.vector_store %arg5[%c0_5, %c0_6], %5 {strides = array<i32>} : memref<8x128xf32, #tpu.memory_space<vmem>>, vector<8x128xf32>,
    return
  }
  func.func @transform_0(%arg0: i32, %arg1: i32) -> (i32, i32) {
    %c0_i32 = arith.constant 0 : i32
    %c0_i32_0 = arith.constant 0 : i32
    return %arg1, %c0_i32 : i32, i32
  }
  func.func @transform_1(%arg0: i32, %arg1: i32) -> (i32, i32) {
    %c0_i32 = arith.constant 0 : i32
    %c0_i32_0 = arith.constant 0 : i32
    return %c0_i32, %arg0 : i32, i32
  }
  func.func @transform_2(%arg0: i32, %arg1: i32) -> (i32, i32) {
    %c0_i32 = arith.constant 0 : i32
    %c0_i32_0 = arith.constant 0 : i32
    return %c0_i32, %arg0 : i32, i32
  }
  func.func @transform_3(%arg0: i32, %arg1: i32) -> (i32, i32) {
    %c0_i32 = arith.constant 0 : i32
    return %arg1, %arg0 : i32, i32
  }
}

</mosaic_0001>

<llo_original>
// kernel: tpu_custom_call.1
$region0: #{tpu_custom_call.1}
  #allocation0 [shape = 'u32[]', space=smem, size = 0x4, offset = 0x4, fixed_abs, tag = 'smem constant byte address 0x4 - core index']
  #allocation1 [shape = 'u32[144,128]{1,0:T(1,128)}', space=vmem, size = 0x12000, scoped, tag = 'internal scratch']
  %s0 = inlined_call_operand.hbm [shape: f32[8,32], index: 0, kind: input, shape index: {}]
  %s1 = inlined_call_operand.hbm [shape: f32[32,128], index: 1, kind: input, shape index: {}]
  %s2 = inlined_call_operand.vmem [shape: f32[1,128], index: 2, kind: input, shape index: {}]
  %s3 = inlined_call_operand.hbm [shape: f32[8,16], index: 3, kind: output, shape index: {}]
  %s4 = sld [smem:[#allocation0]]
  $region30: #{tpu_custom_call.1} parent=0
    _
  %s6 = ssub.s32 1, %s4
  %s7 = scalar_select 0, %s6, %s4
  $region1: #{tpu_custom_call.1} parent=0
    #allocation2 [shape = 'u8[4096]{0}', space=vmem, size = 0x1000, scoped, tag = 'input window, operand 0, single buffered']
    #allocation3 [shape = 's32[1]{0}', space=sflag, size = 0x4, scoped, tag = 'scoped memory for tpu_custom_call.1']
    #allocation4 [shape = 's32[1]{0}', space=sflag, size = 0x4, scoped, tag = 'scoped memory for tpu_custom_call.1']
    #allocation5 [shape = 'u8[16384]{0}', space=vmem, size = 0x4000, scoped, tag = 'input window, operand 1, single buffered']
    #allocation6 [shape = 's32[1]{0}', space=sflag, size = 0x4, scoped, tag = 'scoped memory for tpu_custom_call.1']
    #allocation7 [shape = 'u8[4096]{0}', space=vmem, size = 0x1000, scoped, tag = 'output window, operand 0, single buffered']
    %8 = vsyncpa [#allocation3], 0
    %9 = vsyncpa [#allocation6], 0
    %10 = vsyncpa [#allocation4], 0
    // Predicated region
    $region2: #{tpu_custom_call.1} parent=1 // pred_check
      _
    $region3: #{tpu_custom_call.1} parent=1 // pred_check_branch
      %12 = sbr.rel (0) target = $region5
    $region4: #{tpu_custom_call.1} parent=1 // pred_region
      %s14 = ssub.s32 128, 128
      %15 = vsyncadd [#allocation3], %s14
      %s17 = sshll.u32 [#allocation2], 4
      %s18 = int_to_ptr.vmem [resolvable:$true] %s17
      %20 = dma.hbm_to_vmem [thread:$0]  %s0, 128, %s18, [#allocation3]
    $region5: #{tpu_custom_call.1} parent=1 // pred_fallthru
      _
    // Predicated region
    $region6: #{tpu_custom_call.1} parent=1 // pred_check
      _
    $region7: #{tpu_custom_call.1} parent=1 // pred_check_branch
      %22 = sbr.rel (0) target = $region9
    $region8: #{tpu_custom_call.1} parent=1 // pred_region
      %s24 = ssub.s32 512, 512
      %25 = vsyncadd [#allocation6], %s24
      %s26 = sshll.u32 [#allocation5], 4
      %s27 = int_to_ptr.vmem [resolvable:$true] %s26
      %32 = dma.hbm_to_vmem [thread:$0]  %s1, 512, %s27, [#allocation6], 128, 128, 8
    $region9: #{tpu_custom_call.1} parent=1 // pred_fallthru
      _
    // Predicated region
    $region10: #{tpu_custom_call.1} parent=1 // pred_check
      _
    $region11: #{tpu_custom_call.1} parent=1 // pred_check_branch
      %34 = sbr.rel (0) target = $region13
    $region12: #{tpu_custom_call.1} parent=1 // pred_region
      _
    $region13: #{tpu_custom_call.1} parent=1 // pred_fallthru
      _
    // Predicated region
    $region14: #{tpu_custom_call.1} parent=1 // pred_check
      _
    $region15: #{tpu_custom_call.1} parent=1 // pred_check_branch
      %36 = sbr.rel (0) target = $region17
    $region16: #{tpu_custom_call.1} parent=1 // pred_region
      %37 = dma.done [#allocation3], 128
    $region17: #{tpu_custom_call.1} parent=1 // pred_fallthru
      _
    // Predicated region
    $region18: #{tpu_custom_call.1} parent=1 // pred_check
      _
    $region19: #{tpu_custom_call.1} parent=1 // pred_check_branch
      %39 = sbr.rel (0) target = $region21
    $region20: #{tpu_custom_call.1} parent=1 // pred_region
      %40 = dma.done [#allocation6], 512
    $region21: #{tpu_custom_call.1} parent=1 // pred_fallthru
      _
    %v41 = vld [vmem:[#allocation2] sm:$0xff]
    %v42 = vld [vmem:[#allocation5] sm:$0xff]
    %v43 = vld [vmem:[#allocation5 + $0x8] sm:$0xff]
    %v44 = vld [vmem:[#allocation5 + $0x10] sm:$0xff]
    %v45 = vld [vmem:[#allocation5 + $0x18] sm:$0xff]
    %v46 = vld [vmem:[%s2] sm:$0x1]
    %v48 = vlaneseq
    %v49 = vshrl.u32 %v48, 7
    %v50 = vsub.s32 0, %v49
    %v51 = vrot.slane %v46, %v50
    %vm53 = vcmask 261120
    %v55 = vsel %vm53, %v41, 0
    %57 = vmatprep.subr.mxu0 0.0
    %58 = vmatpush1.msra.mxu0 0.0
    %59 = vmatprep.subr.mxu0 0.0
    %60 = vmatpush1.msra.mxu0 0.0
    %61 = vmatprep.subr.mxu0 0.0
    %62 = vmatpush1.msra.mxu0 0.0
    %63 = vmatprep.subr.mxu0 0.0
    %64 = vmatpush1.msra.mxu0 0.0
    %65 = vmatprep.subr.mxu0 0.0
    %66 = vmatpush1.msra.mxu0 0.0
    %67 = vmatprep.subr.mxu0 0.0
    %68 = vmatpush1.msra.mxu0 0.0
    %69 = vmatprep.subr.mxu0 0.0
    %70 = vmatpush1.msra.mxu0 0.0
    %71 = vmatprep.subr.mxu0 0.0
    %72 = vmatpush1.msra.mxu0 0.0
    %73 = vmatprep.subr.mxu0 0.0
    %74 = vmatpush1.msra.mxu0 0.0
    %75 = vmatprep.subr.mxu0 0.0
    %76 = vmatpush1.msra.mxu0 0.0
    %77 = vmatprep.subr.mxu0 0.0
    %78 = vmatpush1.msra.mxu0 0.0
    %79 = vmatprep.subr.mxu0 0.0
    %80 = vmatpush1.msra.mxu0 0.0
    %81 = vmatprep.subr.mxu0 0.0
    %82 = vmatpush1.msra.mxu0 %v45
    %83 = vmatprep.subr.mxu0 0.0
    %84 = vmatpush1.msra.mxu0 %v44
    %85 = vmatprep.subr.mxu0 0.0
    %86 = vmatpush1.msra.mxu0 %v43
    %87 = vmatprep.subr.mxu0 0.0
    %88 = vmatpush1.msra.mxu0 %v42
    %89 = vmatprep.subr.mxu0 0.0
    %90 = vmatpush2.msra.mxu0 0.0
    %91 = vmatprep.subr.mxu0 0.0
    %92 = vmatpush2.msra.mxu0 0.0
    %93 = vmatprep.subr.mxu0 0.0
    %94 = vmatpush2.msra.mxu0 0.0
    %95 = vmatprep.subr.mxu0 0.0
    %96 = vmatpush2.msra.mxu0 0.0
    %97 = vmatprep.subr.mxu0 0.0
    %98 = vmatpush2.msra.mxu0 0.0
    %99 = vmatprep.subr.mxu0 0.0
    %100 = vmatpush2.msra.mxu0 0.0
    %101 = vmatprep.subr.mxu0 0.0
    %102 = vmatpush2.msra.mxu0 0.0
    %103 = vmatprep.subr.mxu0 0.0
    %104 = vmatpush2.msra.mxu0 0.0
    %105 = vmatprep.subr.mxu0 0.0
    %106 = vmatpush2.msra.mxu0 0.0
    %107 = vmatprep.subr.mxu0 0.0
    %108 = vmatpush2.msra.mxu0 0.0
    %109 = vmatprep.subr.mxu0 0.0
    %110 = vmatpush2.msra.mxu0 0.0
    %111 = vmatprep.subr.mxu0 0.0
    %112 = vmatpush2.msra.mxu0 0.0
    %113 = vmatprep.subr.mxu0 0.0
    %114 = vmatpush2.msra.mxu0 0.0
    %115 = vmatprep.subr.mxu0 0.0
    %116 = vmatpush2.msra.mxu0 0.0
    %117 = vmatprep.subr.mxu0 0.0
    %118 = vmatpush2.msra.mxu0 0.0
    %119 = vmatprep.subr.mxu0 0.0
    %120 = vmatpush2.msra.mxu0 0.0
    %121 = vmatprep.mubr.f32.mxu0 0.0
    %122 = vmatmul.mubr.f32.gmra.mxu0 %v55
    %v123 = vpop.f32.mrf.mxu0
    %v124 = vadd.f32 %v51, %v123
    %v125 = vpop.f32.mrf.mxu0
    %126 = vdwg.mxu0
    %127 = vst [vmem:[#allocation7] sm:$0xff] %v124
    // Predicated region
    $region22: #{tpu_custom_call.1} parent=1 // pred_check
      _
    $region23: #{tpu_custom_call.1} parent=1 // pred_check_branch
      %129 = sbr.rel (0) target = $region25
    $region24: #{tpu_custom_call.1} parent=1 // pred_region
      %s131 = ssub.s32 128, 128
      %132 = vsyncadd [#allocation4], %s131
      %s134 = sshll.u32 [#allocation7], 4
      %s135 = int_to_ptr.vmem [resolvable:$true] %s134
      %137 = dma.vmem_to_hbm [thread:$0]  %s135, 128, %s3, [#allocation4]
    $region25: #{tpu_custom_call.1} parent=1 // pred_fallthru
      _
    // Predicated region
    $region26: #{tpu_custom_call.1} parent=1 // pred_check
      _
    $region27: #{tpu_custom_call.1} parent=1 // pred_check_branch
      %139 = sbr.rel (0) target = $region29
    $region28: #{tpu_custom_call.1} parent=1 // pred_region
      %140 = dma.done [#allocation4], 128
    $region29: #{tpu_custom_call.1} parent=1 // pred_fallthru
      _
    %141 = vsyncpa [#allocation3], 1
    %142 = vsyncpa [#allocation6], 1
    %143 = vsyncpa [#allocation4], 1

</llo_original>
